<compile_context>
chip_gen: v7x
topology: tpu7x:2x2x1
jax: 0.10.0
libtpu: 0.0.40
codegen_flags: <defaults>
</compile_context>

<pallas_src>
import jax
import jax.numpy as jnp
from jax.experimental import pallas as pl
from jax.experimental.pallas import tpu as pltpu

LANE = 128


def _vmem_limit_bytes():
    """Generation-aware VMEM budget: ~3/4 of per-core VMEM (v5e/v6e -> 96 MiB,
    v7x -> 48 MiB), falling back to the 32 MiB scoped default."""
    default = 32 * 1024 * 1024
    try:
        cap = getattr(pltpu.get_tpu_info(), "vmem_capacity_bytes", None)
        if not cap:
            return default
        return int(min(cap * 3 // 4, 100 * 1024 * 1024))
    except Exception:
        return default


def _pick_tiles(n_dst, n_src, tm_req, tk_req):
    """Lane/MXU-friendly tiles, clamped for small graphs.  Keeps >= 2 dst
    blocks when possible so the 'parallel' dst axis shards across v7x's two
    TensorCores instead of idling one core."""
    base_dst = pl.cdiv(n_dst, LANE) * LANE
    base_src = pl.cdiv(n_src, LANE) * LANE
    tm = max(LANE, (min(tm_req, base_dst) // LANE) * LANE)
    tk = max(LANE, (min(tk_req, base_src) // LANE) * LANE)
    if base_dst // tm < 2 and base_dst >= 2 * LANE:
        tm = max(LANE, ((base_dst // 2) // LANE) * LANE)
    return tm, tk


def _pad2d(a, rows, cols, dtype):
    """Pad/cast to (rows, cols) dtype; zero-copy when already in that format."""
    if a.shape == (rows, cols) and a.dtype == dtype:
        return a
    out = jnp.zeros((rows, cols), dtype)
    return out.at[: a.shape[0], : a.shape[1]].set(a.astype(dtype))


def _graph_conv_kernel(adj_ref, x_ref, wT_ref, b_ref, o_ref):
    k = pl.program_id(1)

    @pl.when(k == 0)
    def _():
        o_ref[...] = jnp.zeros_like(o_ref)

    # Fused tiny projection for this src tile (bf16 x bf16 -> f32 on the MXU),
    # cast back to bf16 so the dominant aggregation matmul below is a single
    # native bf16 MXU pass with f32 accumulation.
    xw = jnp.dot(
        x_ref[...], wT_ref[...], preferred_element_type=jnp.float32
    ).astype(jnp.bfloat16)

    # The output block index is constant over k, so the f32 output block stays
    # resident in VMEM: accumulate into it directly (no scratch, no finalize).
    o_ref[...] += jnp.dot(adj_ref[...], xw, preferred_element_type=jnp.float32)

    @pl.when(k == pl.num_programs(1) - 1)
    def _():
        o_ref[...] += b_ref[...]


def graph_conv(adj, x, weight, bias, *, tm=512, tk=512):
    """GraphConv forward:  out = A @ x @ W^T + b.

    adj:    [N_dst, N_src] 0/1 adjacency (bf16 preferred; 0/1 is exact in bf16).
    x:      [N_src, in_feats] node features.
    weight: [n_classes, in_feats], bias: [n_classes]  (nn.Linear parameters).
    Returns [N_dst, n_classes] float32.
    """
    n_dst, n_src = adj.shape
    assert x.shape[0] == n_src, "x rows must match adjacency source dim"
    in_feats = x.shape[1]
    n_classes = weight.shape[0]
    c_pad = pl.cdiv(n_classes, LANE) * LANE  # lane-dense output stores

    tm, tk = _pick_tiles(n_dst, n_src, tm, tk)
    nr = pl.cdiv(n_dst, tm) * tm
    nc = pl.cdiv(n_src, tk) * tk
    grid = (nr // tm, nc // tk)

    adj_p = _pad2d(adj, nr, nc, jnp.bfloat16)            # no-op if pre-stored bf16
    x_p = _pad2d(x, nc, in_feats, jnp.bfloat16)
    wT_p = _pad2d(weight.T, in_feats, c_pad, jnp.bfloat16)
    b_p = _pad2d(bias.reshape(1, -1), 1, c_pad, jnp.float32)

    out_p = pl.pallas_call(
        _graph_conv_kernel,
        out_shape=jax.ShapeDtypeStruct((nr, c_pad), jnp.float32),
        grid_spec=pltpu.PrefetchScalarGridSpec(
            num_scalar_prefetch=0,
            grid=grid,
            in_specs=[
                pl.BlockSpec((tm, tk), lambda i, k: (i, k)),           # A (bf16)
                pl.BlockSpec((tk, in_feats), lambda i, k: (k, 0)),     # x k-tile
                pl.BlockSpec((in_feats, c_pad), lambda i, k: (0, 0)),  # W^T resident
                pl.BlockSpec((1, c_pad), lambda i, k: (0, 0)),         # bias row
            ],
            out_specs=pl.BlockSpec((tm, c_pad), lambda i, k: (i, 0)),
        ),
        compiler_params=pltpu.CompilerParams(
            dimension_semantics=("parallel", "arbitrary"),
            vmem_limit_bytes=_vmem_limit_bytes()),
        cost_estimate=pl.CostEstimate(
            flops=2 * nr * nc * c_pad + 2 * grid[0] * nc * in_feats * c_pad,
            transcendentals=0,
            bytes_accessed=(nr * nc * 2                    # adjacency stream (bf16)
                            + grid[0] * nc * in_feats * 2  # x re-streamed per dst tile
                            + in_feats * c_pad * 2         # resident W^T
                            + nr * c_pad * 4 + c_pad * 4)),  # output write + bias
    )(adj_p, x_p, wT_p, b_p)

    return out_p[:n_dst, :n_classes]


if __name__ == "__main__":
    key = jax.random.PRNGKey(0)
    N = 256          # number of graph nodes
    in_feats = 32
    n_classes = 16

    k_adj, k_x, k_w, k_b = jax.random.split(key, 4)

    # Random sparse-ish graph, stored directly in the kernel's bf16 format
    # (0/1 is exact in bf16) so the wrapper does no pad/convert pass.
    adj = (jax.random.uniform(k_adj, (N, N)) < 0.1).astype(jnp.bfloat16)
    x = jax.random.normal(k_x, (N, in_feats), dtype=jnp.float32)

    # nn.Linear(in_feats, n_classes): weight [n_classes, in_feats], bias [n_classes]
    bound = 1.0 / (in_feats ** 0.5)
    weight = jax.random.uniform(k_w, (n_classes, in_feats),
                                minval=-bound, maxval=bound, dtype=jnp.float32)
    bias = jax.random.uniform(k_b, (n_classes,),
                              minval=-bound, maxval=bound, dtype=jnp.float32)

    out = graph_conv(adj, x, weight, bias)
    out = jax.block_until_ready(out)
    assert out.shape == (N, n_classes)

    hp = jax.lax.Precision.HIGHEST
    adj_f32 = adj.astype(jnp.float32)

    # Strict reference mirroring the kernel's bf16 storage (x, W^T, xw in bf16,
    # all accumulation in f32) -> tight check of the aggregation+linear math.
    xb = x.astype(jnp.bfloat16).astype(jnp.float32)
    wTb = weight.T.astype(jnp.bfloat16).astype(jnp.float32)
    xw_ref = jnp.dot(xb, wTb, precision=hp).astype(jnp.bfloat16).astype(jnp.float32)
    ref_bf16_path = jnp.dot(adj_f32, xw_ref, precision=hp) + bias
    assert jnp.allclose(out, ref_bf16_path, atol=1e-2, rtol=1e-2), \
        float(jnp.max(jnp.abs(out - ref_bf16_path)))

    # Loose sanity check against the full-f32 reference (bf16-class precision).
    ref_f32 = jnp.dot(jnp.dot(adj_f32, x, precision=hp), weight.T, precision=hp) + bias
    assert jnp.allclose(out, ref_f32, atol=1e-1, rtol=1e-1), \
        float(jnp.max(jnp.abs(out - ref_f32)))

    print("KERNEL_OK")
</pallas_src>

<mosaic_0001>
module attributes {stable_mosaic.version = 11 : i64} {
  func.func @_graph_conv_kernel(%arg0: i32, %arg1: i32, %arg2: memref<128x256xbf16, #tpu.memory_space<vmem>>, %arg3: memref<256x32xbf16, #tpu.memory_space<vmem>>, %arg4: memref<32x128xbf16, #tpu.memory_space<vmem>>, %arg5: memref<1x128xf32, #tpu.memory_space<vmem>>, %arg6: memref<128x128xf32, #tpu.memory_space<vmem>>) attributes {dimension_semantics = [#tpu.dimension_semantics<parallel>, #tpu.dimension_semantics<arbitrary>], iteration_bounds = array<i64: 2, 1>, scalar_prefetch = 0 : i64, scratch_operands = 0 : i64, tpu.core_type = #tpu.core_type<tc>, window_params = [{transform_indices = @transform_0, window_bounds = array<i64: 128, 256>}, {transform_indices = @transform_1, window_bounds = array<i64: 256, 32>}, {pipeline_mode = #tpu.pipeline_mode<synchronous>, transform_indices = @transform_2, window_bounds = array<i64: 32, 128>}, {pipeline_mode = #tpu.pipeline_mode<synchronous>, transform_indices = @transform_3, window_bounds = array<i64: 1, 128>}, {transform_indices = @transform_4, window_bounds = array<i64: 128, 128>}]} {
    %c0_i32 = arith.constant 0 : i32
    %0 = arith.cmpi eq, %arg1, %c0_i32 : i32
    %1 = arith.extui %0 : i1 to i32
    %c0_i32_0 = arith.constant 0 : i32
    %2 = arith.cmpi ne, %1, %c0_i32_0 : i32
    scf.if %2 {
      %cst_13 = arith.constant 0.000000e+00 : f32
      %15 = vector.broadcast %cst_13 : f32 to vector<128x128xf32>
      %c0_14 = arith.constant 0 : index
      %c0_15 = arith.constant 0 : index
      %16 = vector.load %arg6[%c0_14, %c0_15] : memref<128x128xf32, #tpu.memory_space<vmem>>, vector<128x128xf32>
      tpu.vector_store %arg6[%c0_14, %c0_15], %15 {strides = array<i32>} : memref<128x128xf32, #tpu.memory_space<vmem>>, vector<128x128xf32>,
    } else {
    }
    %c0 = arith.constant 0 : index
    %c0_1 = arith.constant 0 : index
    %3 = vector.load %arg3[%c0, %c0_1] : memref<256x32xbf16, #tpu.memory_space<vmem>>, vector<256x32xbf16>
    %c0_2 = arith.constant 0 : index
    %c0_3 = arith.constant 0 : index
    %4 = vector.load %arg4[%c0_2, %c0_3] : memref<32x128xbf16, #tpu.memory_space<vmem>>, vector<32x128xbf16>
    %cst = arith.constant dense<0.000000e+00> : vector<256x128xf32>
    %5 = tpu.matmul %3, %4, %cst {dimension_numbers = #tpu.dot_dimension_numbers<[1], [0], [0], [1], [0, 0, 1, 1], [], []>} : vector<256x32xbf16>, vector<32x128xbf16>, vector<256x128xf32> -> vector<256x128xf32>
    %6 = arith.truncf %5 : vector<256x128xf32> to vector<256x128xbf16>
    %c0_4 = arith.constant 0 : index
    %c0_5 = arith.constant 0 : index
    %7 = vector.load %arg6[%c0_4, %c0_5] : memref<128x128xf32, #tpu.memory_space<vmem>>, vector<128x128xf32>
    %c0_6 = arith.constant 0 : index
    %c0_7 = arith.constant 0 : index
    %8 = vector.load %arg2[%c0_6, %c0_7] : memref<128x256xbf16, #tpu.memory_space<vmem>>, vector<128x256xbf16>
    %cst_8 = arith.constant dense<0.000000e+00> : vector<128x128xf32>
    %9 = tpu.matmul %8, %6, %cst_8 {dimension_numbers = #tpu.dot_dimension_numbers<[1], [0], [0], [1], [0, 0, 1, 1], [], []>} : vector<128x256xbf16>, vector<256x128xbf16>, vector<128x128xf32> -> vector<128x128xf32>
    %10 = arith.addf %7, %9 : vector<128x128xf32>
    %c0_9 = arith.constant 0 : index
    %c0_10 = arith.constant 0 : index
    %11 = vector.load %arg6[%c0_9, %c0_10] : memref<128x128xf32, #tpu.memory_space<vmem>>, vector<128x128xf32>
    tpu.vector_store %arg6[%c0_9, %c0_10], %10 {strides = array<i32>} : memref<128x128xf32, #tpu.memory_space<vmem>>, vector<128x128xf32>,
    %c0_i32_11 = arith.constant 0 : i32
    %12 = arith.cmpi eq, %arg1, %c0_i32_11 : i32
    %13 = arith.extui %12 : i1 to i32
    %c0_i32_12 = arith.constant 0 : i32
    %14 = arith.cmpi ne, %13, %c0_i32_12 : i32
    scf.if %14 {
      %c0_13 = arith.constant 0 : index
      %c0_14 = arith.constant 0 : index
      %15 = vector.load %arg6[%c0_13, %c0_14] : memref<128x128xf32, #tpu.memory_space<vmem>>, vector<128x128xf32>
      %c0_15 = arith.constant 0 : index
      %c0_16 = arith.constant 0 : index
      %16 = vector.load %arg5[%c0_15, %c0_16] : memref<1x128xf32, #tpu.memory_space<vmem>>, vector<1x128xf32>
      %17 = vector.broadcast %16 : vector<1x128xf32> to vector<128x128xf32>
      %18 = arith.addf %15, %17 : vector<128x128xf32>
      %c0_17 = arith.constant 0 : index
      %c0_18 = arith.constant 0 : index
      %19 = vector.load %arg6[%c0_17, %c0_18] : memref<128x128xf32, #tpu.memory_space<vmem>>, vector<128x128xf32>
      tpu.vector_store %arg6[%c0_17, %c0_18], %18 {strides = array<i32>} : memref<128x128xf32, #tpu.memory_space<vmem>>, vector<128x128xf32>,
    } else {
    }
    return
  }
  func.func @transform_0(%arg0: i32, %arg1: i32) -> (i32, i32) {
    %c0_i32 = arith.constant 0 : i32
    return %arg0, %arg1 : i32, i32
  }
  func.func @transform_1(%arg0: i32, %arg1: i32) -> (i32, i32) {
    %c0_i32 = arith.constant 0 : i32
    %c0_i32_0 = arith.constant 0 : i32
    return %arg1, %c0_i32 : i32, i32
  }
  func.func @transform_2(%arg0: i32, %arg1: i32) -> (i32, i32) {
    %c0_i32 = arith.constant 0 : i32
    %c0_i32_0 = arith.constant 0 : i32
    %c0_i32_1 = arith.constant 0 : i32
    return %c0_i32, %c0_i32_0 : i32, i32
  }
  func.func @transform_3(%arg0: i32, %arg1: i32) -> (i32, i32) {
    %c0_i32 = arith.constant 0 : i32
    %c0_i32_0 = arith.constant 0 : i32
    %c0_i32_1 = arith.constant 0 : i32
    return %c0_i32, %c0_i32_0 : i32, i32
  }
  func.func @transform_4(%arg0: i32, %arg1: i32) -> (i32, i32) {
    %c0_i32 = arith.constant 0 : i32
    %c0_i32_0 = arith.constant 0 : i32
    return %arg0, %c0_i32 : i32, i32
  }
}

</mosaic_0001>

<llo_original>
// kernel: tpu_custom_call.1
$region0: #{tpu_custom_call.1}
  #allocation0 [shape = 'u32[]', space=smem, size = 0x4, offset = 0x4, fixed_abs, tag = 'smem constant byte address 0x4 - core index']
  #allocation1 [shape = 'u32[144,128]{1,0:T(1,128)}', space=vmem, size = 0x12000, scoped, tag = 'internal scratch']
  %s0 = inlined_call_operand.hbm [shape: bf16[256,256], index: 0, kind: input, shape index: {}]
  %s1 = inlined_call_operand.vmem [shape: bf16[256,32], index: 1, kind: input, shape index: {}]
  %s2 = inlined_call_operand.vmem [shape: bf16[32,128], index: 2, kind: input, shape index: {}]
  %s3 = inlined_call_operand.vmem [shape: f32[1,128], index: 3, kind: input, shape index: {}]
  %s4 = inlined_call_operand.hbm [shape: f32[256,128], index: 4, kind: output, shape index: {}]
  %s5 = sld [smem:[#allocation0]]
  $region61: #{tpu_custom_call.1} parent=0
    _
  %s7 = ssub.s32 1, %s5
  %s8 = scalar_select 0, %s7, %s5
  $region1: #{tpu_custom_call.1} parent=0
    #allocation2 [shape = 'u8[131072]{0}', space=vmem, size = 0x20000, scoped, tag = 'input window, operand 0']
    #allocation3 [shape = 's32[2]{0}', space=sflag, size = 0x8, scoped, tag = 'scoped memory for tpu_custom_call.1']
    #allocation4 [shape = 's32[2]{0}', space=sflag, size = 0x8, scoped, tag = 'scoped memory for tpu_custom_call.1']
    #allocation5 [shape = 'u8[131072]{0}', space=vmem, size = 0x20000, scoped, tag = 'output window, operand 0']
    %9 = vsyncpa [#allocation3], 0
    %s10 = scalar_lea.sflag [#allocation3], 1
    %11 = vsyncpa %s10, 0
    %12 = vsyncpa [#allocation4], 0
    %s13 = scalar_lea.sflag [#allocation4], 1
    %14 = vsyncpa %s13, 0
    loop: start=0, step=1, limit=4
    $region2: #{tpu_custom_call.1} parent=1 // loop_pre_header
      _
    $region3: #{tpu_custom_call.1} parent=1 // loop_header
      %s16 = sphi 0, %s20
      %p17 = scmp.ge.s32.totalorder %s16, 4
      %s23 = sphi 0, %s35
      %s24 = sphi 0, %s31
      %s25 = sphi 0, %s23
      %s26 = sphi 0, %s24
      %s27 = sphi 0, %s25
      %s28 = sphi 0, %s26
      %s40 = sphi 0, %s42
      %s43 = sphi 0, %s40
      %s44 = sphi 0, %s43
      %s60 = sphi 0, %s44
      %s66 = sphi 0, %s68
      %s69 = sphi 0, %s66
      %s70 = sphi 0, %s69
      %s86 = sphi 0, %s70
      %s90 = sphi 0, %s90
      %s92 = sphi 0, %s90
      %s93 = sphi 0, %s92
      %s107 = sphi 0, %s93
      %s111 = sphi 0, %s111
      %s113 = sphi 0, %s111
      %s114 = sphi 0, %s113
      %s128 = sphi 0, %s114
      %s134 = sphi 0, %s136
      %s137 = sphi 0, %s134
      %s138 = sphi 0, %s137
      %s154 = sphi 0, %s138
    $region4: #{tpu_custom_call.1} parent=1 // loop_header_branch
      %19 = sbr.rel (%p17) target = $region8
    $region5: #{tpu_custom_call.1} parent=1 // loop_body
      %s21 = ssub.s32 %s16, 1
      %s22 = ssub.s32 %s16, 2
      %s29 = sadd.s32 1, %s24
      %p30 = scmp.ge.s32.totalorder %s29, 1
      %s31 = scalar_select %p30, 0, %s29
      %s32 = sadd.s32 1, %s23
      %s33 = scalar_select %p30, %s32, %s23
      %p34 = scmp.ge.s32.totalorder %s33, 2
      %s35 = scalar_select %p34, 0, %s33
      %s36 = ssub.s32 %s23, %s35
      %s37 = ssub.s32 %s24, %s31
      %s38 = sor.u32 %s36, %s37
      %p39 = scmp.eq.s32.totalorder %s38, 0
      %s41 = sadd.s32 %s40, 1
      %s42 = scalar_select %p39, %s40, %s41
      %p45 = pneg %p39
      %p46 = scmp.eq.s32.totalorder %s16, 1
      %p47 = por %p45, %p46
      %p48 = scmp.ne.s32.totalorder %s40, %s43
      %p49 = scmp.eq.s32.totalorder %s16, 0
      %p50 = por %p48, %p49
      %p51 = scmp.ne.s32.totalorder %s40, %s43
      %p52 = scmp.eq.s32.totalorder %s21, 1
      %p53 = por %p51, %p52
      %p54 = scmp.ne.s32.totalorder %s43, %s44
      %p55 = scmp.eq.s32.totalorder %s21, 0
      %p56 = por %p54, %p55
      %p57 = scmp.ne.s32.totalorder %s43, %s44
      %p58 = scmp.eq.s32.totalorder %s22, 1
      %p59 = por %p57, %p58
      %p61 = scmp.ne.s32.totalorder %s44, %s60
      %p62 = scmp.eq.s32.totalorder %s22, 0
      %p63 = por %p61, %p62
      %s64 = ssub.s32 %s24, %s31
      %p65 = scmp.eq.s32.totalorder %s64, 0
      %s67 = sadd.s32 %s66, 1
      %s68 = scalar_select %p65, %s66, %s67
      %p71 = pneg %p65
      %p72 = scmp.eq.s32.totalorder %s16, 1
      %p73 = por %p71, %p72
      %p74 = scmp.ne.s32.totalorder %s66, %s69
      %p75 = scmp.eq.s32.totalorder %s16, 0
      %p76 = por %p74, %p75
      %p77 = scmp.ne.s32.totalorder %s66, %s69
      %p78 = scmp.eq.s32.totalorder %s21, 1
      %p79 = por %p77, %p78
      %p80 = scmp.ne.s32.totalorder %s69, %s70
      %p81 = scmp.eq.s32.totalorder %s21, 0
      %p82 = por %p80, %p81
      %p83 = scmp.ne.s32.totalorder %s69, %s70
      %p84 = scmp.eq.s32.totalorder %s22, 1
      %p85 = por %p83, %p84
      %p87 = scmp.ne.s32.totalorder %s70, %s86
      %p88 = scmp.eq.s32.totalorder %s22, 0
      %p89 = por %p87, %p88
      %s91 = sadd.s32 %s90, 1
      %p94 = scmp.eq.s32.totalorder %s16, 1
      %p95 = scmp.ne.s32.totalorder %s90, %s92
      %p96 = scmp.eq.s32.totalorder %s16, 0
      %p97 = por %p95, %p96
      %p98 = scmp.ne.s32.totalorder %s90, %s92
      %p99 = scmp.eq.s32.totalorder %s21, 1
      %p100 = por %p98, %p99
      %p101 = scmp.ne.s32.totalorder %s92, %s93
      %p102 = scmp.eq.s32.totalorder %s21, 0
      %p103 = por %p101, %p102
      %p104 = scmp.ne.s32.totalorder %s92, %s93
      %p105 = scmp.eq.s32.totalorder %s22, 1
      %p106 = por %p104, %p105
      %p108 = scmp.ne.s32.totalorder %s93, %s107
      %p109 = scmp.eq.s32.totalorder %s22, 0
      %p110 = por %p108, %p109
      %s112 = sadd.s32 %s111, 1
      %p115 = scmp.eq.s32.totalorder %s16, 1
      %p116 = scmp.ne.s32.totalorder %s111, %s113
      %p117 = scmp.eq.s32.totalorder %s16, 0
      %p118 = por %p116, %p117
      %p119 = scmp.ne.s32.totalorder %s111, %s113
      %p120 = scmp.eq.s32.totalorder %s21, 1
      %p121 = por %p119, %p120
      %p122 = scmp.ne.s32.totalorder %s113, %s114
      %p123 = scmp.eq.s32.totalorder %s21, 0
      %p124 = por %p122, %p123
      %p125 = scmp.ne.s32.totalorder %s113, %s114
      %p126 = scmp.eq.s32.totalorder %s22, 1
      %p127 = por %p125, %p126
      %p129 = scmp.ne.s32.totalorder %s114, %s128
      %p130 = scmp.eq.s32.totalorder %s22, 0
      %p131 = por %p129, %p130
      %s132 = ssub.s32 %s23, %s35
      %p133 = scmp.eq.s32.totalorder %s132, 0
      %s135 = sadd.s32 %s134, 1
      %s136 = scalar_select %p133, %s134, %s135
      %p139 = pneg %p133
      %p140 = scmp.eq.s32.totalorder %s16, 1
      %p141 = por %p139, %p140
      %p142 = scmp.ne.s32.totalorder %s134, %s137
      %p143 = scmp.eq.s32.totalorder %s16, 0
      %p144 = por %p142, %p143
      %p145 = scmp.ne.s32.totalorder %s134, %s137
      %p146 = scmp.eq.s32.totalorder %s21, 1
      %p147 = por %p145, %p146
      %p148 = scmp.ne.s32.totalorder %s137, %s138
      %p149 = scmp.eq.s32.totalorder %s21, 0
      %p150 = por %p148, %p149
      %p151 = scmp.ne.s32.totalorder %s137, %s138
      %p152 = scmp.eq.s32.totalorder %s22, 1
      %p153 = por %p151, %p152
      %p155 = scmp.ne.s32.totalorder %s138, %s154
      %p156 = scmp.eq.s32.totalorder %s22, 0
      %p157 = por %p155, %p156
      %p158 = scmp.le.s32.totalorder 1, %s16
      %p159 = scmp.lt.s32.totalorder %s16, 3
      %p160 = pnand %p158, %p159
      %p161 = pneg %p160
      // Predicated region
      $region9: #{tpu_custom_call.1} parent=5 // pred_check
        _
      $region10: #{tpu_custom_call.1} parent=5 // pred_check_branch
        %163 = sbr.rel (%p160) target = $region12
      $region11: #{tpu_custom_call.1} parent=5 // pred_region
        %s164 = ssub.s32 %s16, 1
        // Predicated region
        $region13: #{tpu_custom_call.1} parent=11 // pred_check
          %p165 = pneg %p82
        $region14: #{tpu_custom_call.1} parent=11 // pred_check_branch
          %167 = sbr.rel (%p165) target = $region16
        $region15: #{tpu_custom_call.1} parent=11 // pred_region
          %s168 = smul.u32 32, %s26
          %p169 = scmp.lt.s32.totalorder %s168, 31
          %s170 = scalar_select %p169, %s168, 31
          %s171 = smul.addr %s170, 4
          %s172 = scalar_lea.vmem %s1, %s171
          %s173 = smul.u32 32, %s26
        $region16: #{tpu_custom_call.1} parent=11 // pred_fallthru
          _
        // Predicated region
        $region17: #{tpu_custom_call.1} parent=11 // pred_check
          %p174 = pneg %p103
        $region18: #{tpu_custom_call.1} parent=11 // pred_check_branch
          %176 = sbr.rel (%p174) target = $region20
        $region19: #{tpu_custom_call.1} parent=11 // pred_region
          _
        $region20: #{tpu_custom_call.1} parent=11 // pred_fallthru
          _
        // Predicated region
        $region21: #{tpu_custom_call.1} parent=11 // pred_check
          %p177 = pneg %p124
        $region22: #{tpu_custom_call.1} parent=11 // pred_check_branch
          %179 = sbr.rel (%p177) target = $region24
        $region23: #{tpu_custom_call.1} parent=11 // pred_region
          _
        $region24: #{tpu_custom_call.1} parent=11 // pred_fallthru
          _
      $region12: #{tpu_custom_call.1} parent=5 // pred_fallthru
        _
      %p180 = scmp.lt.s32.totalorder %s16, 2
      // Predicated region
      $region25: #{tpu_custom_call.1} parent=5 // pred_check
        %p181 = pneg %p180
      $region26: #{tpu_custom_call.1} parent=5 // pred_check_branch
        %183 = sbr.rel (%p181) target = $region28
      $region27: #{tpu_custom_call.1} parent=5 // pred_region
        // Predicated region
        $region29: #{tpu_custom_call.1} parent=27 // pred_check
          %p184 = pneg %p50
        $region30: #{tpu_custom_call.1} parent=27 // pred_check_branch
          %186 = sbr.rel (%p184) target = $region32
        $region31: #{tpu_custom_call.1} parent=27 // pred_region
          %s187 = sand.u32 %s40, 1
          %s188 = scalar_lea.sflag [#allocation3], %s187
          %s189 = sand.u32 %s40, 1
          %s190 = smul.addr %s189, 128
          %s191 = scalar_lea.vmem [#allocation2], %s190
          %s192 = smul.u32 16, %s23
          %s193 = smul.u32 2, %s24
          %s195 = ssub.s32 2048, 2048
          %196 = vsyncadd %s188, %s195
          %s197 = smul.addr %s192, 2
          %s198 = sadd.s32 %s193, %s197
          %s199 = smul.addr %s198, 64
          %s200 = scalar_lea.hbm %s0, %s199
          %s201 = sshll.u32 %s191, 4
          %s202 = int_to_ptr.vmem [resolvable:$true] %s201
          %207 = dma.hbm_to_vmem [thread:$0]  %s200, 2048, %s202, %s188, 128, 128, 8
        $region32: #{tpu_custom_call.1} parent=27 // pred_fallthru
          _
      $region28: #{tpu_custom_call.1} parent=5 // pred_fallthru
        _
      %p208 = scmp.le.s32.totalorder 1, %s16
      %p209 = scmp.lt.s32.totalorder %s16, 3
      %p210 = pnand %p208, %p209
      %p211 = pneg %p210
      // Predicated region
      $region33: #{tpu_custom_call.1} parent=5 // pred_check
        _
      $region34: #{tpu_custom_call.1} parent=5 // pred_check_branch
        %213 = sbr.rel (%p210) target = $region36
      $region35: #{tpu_custom_call.1} parent=5 // pred_region
        %s214 = ssub.s32 %s16, 1
        %s215 = sand.u32 %s43, 1
        %s216 = scalar_lea.sflag [#allocation3], %s215
        %s217 = sand.u32 %s43, 1
        %s218 = smul.addr %s217, 128
        %s219 = scalar_lea.vmem [#allocation2], %s218
        // Predicated region
        $region37: #{tpu_custom_call.1} parent=35 // pred_check
          %p220 = pneg %p56
        $region38: #{tpu_custom_call.1} parent=35 // pred_check_branch
          %222 = sbr.rel (%p220) target = $region40
        $region39: #{tpu_custom_call.1} parent=35 // pred_region
          %223 = dma.done %s216, 2048
        $region40: #{tpu_custom_call.1} parent=35 // pred_fallthru
          _
        %s224 = sand.u32 %s43, 1
        %s225 = scalar_lea.sflag [#allocation3], %s224
        %s226 = sand.u32 %s43, 1
        %s227 = smul.addr %s226, 128
        %s228 = scalar_lea.vmem [#allocation2], %s227
        %p229 = pneg %p56
        %p230 = pneg %p53
        %s231 = smul.u32 32, %s26
        %p232 = scmp.lt.s32.totalorder %s231, 31
        %s233 = scalar_select %p232, %s231, 31
        %s234 = smul.addr %s233, 4
        %s235 = scalar_lea.vmem %s1, %s234
        %p236 = pneg %p82
        %p237 = pneg %p79
        %p238 = pneg %p103
        %p239 = pneg %p100
        %p240 = pneg %p124
        %p241 = pneg %p121
        %p242 = pneg %p150
        %p243 = pneg %p147
        %s244 = sand.u32 %s137, 1
        %s245 = scalar_lea.sflag [#allocation4], %s244
        %s246 = sand.u32 %s137, 1
        %s247 = smul.addr %s246, 128
        %s248 = scalar_lea.vmem [#allocation5], %s247
        %s249 = smul.u32 16, %s25
        %s250 = smul.u32 2, %s26
        %s251 = smul.u32 32, %s26
        %p252 = scmp.lt.s32.totalorder %s251, 31
        %s253 = scalar_select %p252, %s251, 31
        %s254 = smul.addr %s253, 4
        %s255 = scalar_lea.vmem %s1, %s254
        %s256 = smul.u32 32, %s26
        %s257 = smul.u32 16, %s25
        %p259 = scmp.eq.s32.totalorder %s26, 0
        // Predicated region
        $region41: #{tpu_custom_call.1} parent=35 // pred_check
          %p260 = pneg %p259
        $region42: #{tpu_custom_call.1} parent=35 // pred_check_branch
          %262 = sbr.rel (%p260) target = $region44
        $region43: #{tpu_custom_call.1} parent=35 // pred_region
          %263 = vst [vmem:[%s248] sm:$0xff] 0.0
          %264 = vst [vmem:[%s248 + $0x8] sm:$0xff] 0.0
          %265 = vst [vmem:[%s248 + $0x10] sm:$0xff] 0.0
          %266 = vst [vmem:[%s248 + $0x18] sm:$0xff] 0.0
          %267 = vst [vmem:[%s248 + $0x20] sm:$0xff] 0.0
          %268 = vst [vmem:[%s248 + $0x28] sm:$0xff] 0.0
          %269 = vst [vmem:[%s248 + $0x30] sm:$0xff] 0.0
          %270 = vst [vmem:[%s248 + $0x38] sm:$0xff] 0.0
          %271 = vst [vmem:[%s248 + $0x40] sm:$0xff] 0.0
          %272 = vst [vmem:[%s248 + $0x48] sm:$0xff] 0.0
          %273 = vst [vmem:[%s248 + $0x50] sm:$0xff] 0.0
          %274 = vst [vmem:[%s248 + $0x58] sm:$0xff] 0.0
          %275 = vst [vmem:[%s248 + $0x60] sm:$0xff] 0.0
          %276 = vst [vmem:[%s248 + $0x68] sm:$0xff] 0.0
          %277 = vst [vmem:[%s248 + $0x70] sm:$0xff] 0.0
          %278 = vst [vmem:[%s248 + $0x78] sm:$0xff] 0.0
        $region44: #{tpu_custom_call.1} parent=35 // pred_fallthru
          _
        %v279 = vld [vmem:[%s255] sm:$0xf]
        %v280 = vld [vmem:[%s255 + $0x4] sm:$0xf]
        %v281 = vld [vmem:[%s255 + $0x8] sm:$0xf]
        %v282 = vld [vmem:[%s255 + $0xc] sm:$0xf]
        %v283 = vld [vmem:[%s255 + $0x10] sm:$0xf]
        %v284 = vld [vmem:[%s255 + $0x14] sm:$0xf]
        %v285 = vld [vmem:[%s255 + $0x18] sm:$0xf]
        %v286 = vld [vmem:[%s255 + $0x1c] sm:$0xf]
        %v287 = vld [vmem:[%s255 + $0x20] sm:$0xf]
        %v288 = vld [vmem:[%s255 + $0x24] sm:$0xf]
        %v289 = vld [vmem:[%s255 + $0x28] sm:$0xf]
        %v290 = vld [vmem:[%s255 + $0x2c] sm:$0xf]
        %v291 = vld [vmem:[%s255 + $0x30] sm:$0xf]
        %v292 = vld [vmem:[%s255 + $0x34] sm:$0xf]
        %v293 = vld [vmem:[%s255 + $0x38] sm:$0xf]
        %v294 = vld [vmem:[%s255 + $0x3c] sm:$0xf]
        %v295 = vld [vmem:[%s255 + $0x40] sm:$0xf]
        %v296 = vld [vmem:[%s255 + $0x44] sm:$0xf]
        %v297 = vld [vmem:[%s255 + $0x48] sm:$0xf]
        %v298 = vld [vmem:[%s255 + $0x4c] sm:$0xf]
        %v299 = vld [vmem:[%s255 + $0x50] sm:$0xf]
        %v300 = vld [vmem:[%s255 + $0x54] sm:$0xf]
        %v301 = vld [vmem:[%s255 + $0x58] sm:$0xf]
        %v302 = vld [vmem:[%s255 + $0x5c] sm:$0xf]
        %v303 = vld [vmem:[%s255 + $0x60] sm:$0xf]
        %v304 = vld [vmem:[%s255 + $0x64] sm:$0xf]
        %v305 = vld [vmem:[%s255 + $0x68] sm:$0xf]
        %v306 = vld [vmem:[%s255 + $0x6c] sm:$0xf]
        %v307 = vld [vmem:[%s255 + $0x70] sm:$0xf]
        %v308 = vld [vmem:[%s255 + $0x74] sm:$0xf]
        %v309 = vld [vmem:[%s255 + $0x78] sm:$0xf]
        %v310 = vld [vmem:[%s255 + $0x7c] sm:$0xf]
        %v311 = vld [vmem:[%s2] sm:$0xf]
        %v312 = vld [vmem:[%s2 + $0x4] sm:$0xf]
        %v313 = vld [vmem:[%s2 + $0x8] sm:$0xf]
        %v314 = vld [vmem:[%s2 + $0xc] sm:$0xf]
        %v347 = vunpack.c.l.b16 %v279
        %v348 = vunpack.c.l.b16 %v280
        %v349 = vunpack.c.l.b16 %v281
        %v350 = vunpack.c.l.b16 %v282
        %v351 = vunpack.c.l.b16 %v283
        %v352 = vunpack.c.l.b16 %v284
        %v353 = vunpack.c.l.b16 %v285
        %v354 = vunpack.c.l.b16 %v286
        %v355 = vunpack.c.l.b16 %v287
        %v356 = vunpack.c.l.b16 %v288
        %v357 = vunpack.c.l.b16 %v289
        %v358 = vunpack.c.l.b16 %v290
        %v359 = vunpack.c.l.b16 %v291
        %v360 = vunpack.c.l.b16 %v292
        %v361 = vunpack.c.l.b16 %v293
        %v362 = vunpack.c.l.b16 %v294
        %v363 = vunpack.c.l.b16 %v295
        %v364 = vunpack.c.l.b16 %v296
        %v365 = vunpack.c.l.b16 %v297
        %v366 = vunpack.c.l.b16 %v298
        %v367 = vunpack.c.l.b16 %v299
        %v368 = vunpack.c.l.b16 %v300
        %v369 = vunpack.c.l.b16 %v301
        %v370 = vunpack.c.l.b16 %v302
        %v371 = vunpack.c.l.b16 %v303
        %v372 = vunpack.c.l.b16 %v304
        %v373 = vunpack.c.l.b16 %v305
        %v374 = vunpack.c.l.b16 %v306
        %v375 = vunpack.c.l.b16 %v307
        %v376 = vunpack.c.l.b16 %v308
        %v377 = vunpack.c.l.b16 %v309
        %v378 = vunpack.c.l.b16 %v310
        %v379 = vpack.c.b16 %v348, %v347
        %v380 = vpack.c.b16 %v350, %v349
        %v381 = vpack.c.b16 %v352, %v351
        %v382 = vpack.c.b16 %v354, %v353
        %v383 = vpack.c.b16 %v356, %v355
        %v384 = vpack.c.b16 %v358, %v357
        %v385 = vpack.c.b16 %v360, %v359
        %v386 = vpack.c.b16 %v362, %v361
        %v387 = vpack.c.b16 %v364, %v363
        %v388 = vpack.c.b16 %v366, %v365
        %v389 = vpack.c.b16 %v368, %v367
        %v390 = vpack.c.b16 %v370, %v369
        %v391 = vpack.c.b16 %v372, %v371
        %v392 = vpack.c.b16 %v374, %v373
        %v393 = vpack.c.b16 %v376, %v375
        %v394 = vpack.c.b16 %v378, %v377
        %v399 = vunpack.c.l.b16 %v311
        %v400 = vunpack.c.l.b16 %v312
        %v401 = vunpack.c.l.b16 %v313
        %v402 = vunpack.c.l.b16 %v314
        %v403 = vpack.c.b16 %v400, %v399
        %v404 = vpack.c.b16 %v402, %v401
        %vm407 = vcmask 261120
        %v409 = vsel %vm407, %v379, 0
        %v412 = vsel %vm407, %v380, 0
        %v415 = vsel %vm407, %v381, 0
        %v418 = vsel %vm407, %v382, 0
        %v421 = vsel %vm407, %v383, 0
        %v424 = vsel %vm407, %v384, 0
        %v427 = vsel %vm407, %v385, 0
        %v430 = vsel %vm407, %v386, 0
        %v433 = vsel %vm407, %v387, 0
        %v436 = vsel %vm407, %v388, 0
        %v439 = vsel %vm407, %v389, 0
        %v442 = vsel %vm407, %v390, 0
        %v445 = vsel %vm407, %v391, 0
        %v448 = vsel %vm407, %v392, 0
        %v451 = vsel %vm407, %v393, 0
        %v454 = vsel %vm407, %v394, 0
        %456 = vmatprep.subr.bf16.mxu0 0
        %457 = vmatpush1.bf16.msra.mxu0 %v403
        %458 = vmatprep.subr.bf16.mxu0 0
        %459 = vmatpush1.bf16.msra.mxu0 %v404
        %460 = vmatprep.subr.bf16.mxu0 0
        %461 = vmatpush1.bf16.msra.mxu0 0
        %462 = vmatprep.subr.bf16.mxu0 0
        %463 = vmatpush1.bf16.msra.mxu0 0
        %464 = vmatprep.subr.bf16.mxu0 0
        %465 = vmatpush1.bf16.msra.mxu0 0
        %466 = vmatprep.subr.bf16.mxu0 0
        %467 = vmatpush1.bf16.msra.mxu0 0
        %468 = vmatprep.subr.bf16.mxu0 0
        %469 = vmatpush1.bf16.msra.mxu0 0
        %470 = vmatprep.subr.bf16.mxu0 0
        %471 = vmatpush1.bf16.msra.mxu0 0
        %472 = vmatprep.subr.bf16.mxu0 0
        %473 = vmatpush1.bf16.msra.mxu0 0
        %474 = vmatprep.subr.bf16.mxu0 0
        %475 = vmatpush1.bf16.msra.mxu0 0
        %476 = vmatprep.subr.bf16.mxu0 0
        %477 = vmatpush1.bf16.msra.mxu0 0
        %478 = vmatprep.subr.bf16.mxu0 0
        %479 = vmatpush1.bf16.msra.mxu0 0
        %480 = vmatprep.subr.bf16.mxu0 0
        %481 = vmatpush1.bf16.msra.mxu0 0
        %482 = vmatprep.subr.bf16.mxu0 0
        %483 = vmatpush1.bf16.msra.mxu0 0
        %484 = vmatprep.subr.bf16.mxu0 0
        %485 = vmatpush1.bf16.msra.mxu0 0
        %486 = vmatprep.subr.bf16.mxu0 0
        %487 = vmatpush1.bf16.msra.mxu0 0
        %488 = vmatprep.mubr.bf16.mxu0 0
        %489 = vmatmul.mubr.bf16.gmra.mrb[0].mxu0 %v409
        %v490 = vpop.f32.mrb[0].mxu0
        %v491 = vadd.f32 0.0, %v490
        %v492 = vpop.f32.mrb[0].mxu0
        %v493 = vpop.f32.mrb[0].mxu0
        %v494 = vadd.f32 0.0, %v493
        %v495 = vpop.f32.mrb[0].mxu0
        %496 = vmatprep.mubr.bf16.mxu0 0
        %497 = vmatmul.mubr.bf16.gmra.mrb[0].mxu0 %v412
        %v498 = vpop.f32.mrb[0].mxu0
        %v499 = vadd.f32 0.0, %v498
        %v500 = vpop.f32.mrb[0].mxu0
        %v501 = vpop.f32.mrb[0].mxu0
        %v502 = vadd.f32 0.0, %v501
        %v503 = vpop.f32.mrb[0].mxu0
        %504 = vmatprep.mubr.bf16.mxu0 0
        %505 = vmatmul.mubr.bf16.gmra.mrb[0].mxu0 %v415
        %v506 = vpop.f32.mrb[0].mxu0
        %v507 = vadd.f32 0.0, %v506
        %v508 = vpop.f32.mrb[0].mxu0
        %v509 = vpop.f32.mrb[0].mxu0
        %v510 = vadd.f32 0.0, %v509
        %v511 = vpop.f32.mrb[0].mxu0
        %512 = vmatprep.mubr.bf16.mxu0 0
        %513 = vmatmul.mubr.bf16.gmra.mrb[0].mxu0 %v418
        %v514 = vpop.f32.mrb[0].mxu0
        %v515 = vadd.f32 0.0, %v514
        %v516 = vpop.f32.mrb[0].mxu0
        %v517 = vpop.f32.mrb[0].mxu0
        %v518 = vadd.f32 0.0, %v517
        %v519 = vpop.f32.mrb[0].mxu0
        %520 = vmatprep.mubr.bf16.mxu0 0
        %521 = vmatmul.mubr.bf16.gmra.mrb[0].mxu0 %v421
        %v522 = vpop.f32.mrb[0].mxu0
        %v523 = vadd.f32 0.0, %v522
        %v524 = vpop.f32.mrb[0].mxu0
        %v525 = vpop.f32.mrb[0].mxu0
        %v526 = vadd.f32 0.0, %v525
        %v527 = vpop.f32.mrb[0].mxu0
        %528 = vmatprep.mubr.bf16.mxu0 0
        %529 = vmatmul.mubr.bf16.gmra.mrb[0].mxu0 %v424
        %v530 = vpop.f32.mrb[0].mxu0
        %v531 = vadd.f32 0.0, %v530
        %v532 = vpop.f32.mrb[0].mxu0
        %v533 = vpop.f32.mrb[0].mxu0
        %v534 = vadd.f32 0.0, %v533
        %v535 = vpop.f32.mrb[0].mxu0
        %536 = vmatprep.mubr.bf16.mxu0 0
        %537 = vmatmul.mubr.bf16.gmra.mrb[0].mxu0 %v427
        %v538 = vpop.f32.mrb[0].mxu0
        %v539 = vadd.f32 0.0, %v538
        %v540 = vpop.f32.mrb[0].mxu0
        %v541 = vpop.f32.mrb[0].mxu0
        %v542 = vadd.f32 0.0, %v541
        %v543 = vpop.f32.mrb[0].mxu0
        %544 = vmatprep.mubr.bf16.mxu0 0
        %545 = vmatmul.mubr.bf16.gmra.mrb[0].mxu0 %v430
        %v546 = vpop.f32.mrb[0].mxu0
        %v547 = vadd.f32 0.0, %v546
        %v548 = vpop.f32.mrb[0].mxu0
        %v549 = vpop.f32.mrb[0].mxu0
        %v550 = vadd.f32 0.0, %v549
        %v551 = vpop.f32.mrb[0].mxu0
        %552 = vmatprep.mubr.bf16.mxu0 0
        %553 = vmatmul.mubr.bf16.gmra.mrb[0].mxu0 %v433
        %v554 = vpop.f32.mrb[0].mxu0
        %v555 = vadd.f32 0.0, %v554
        %v556 = vpop.f32.mrb[0].mxu0
        %v557 = vpop.f32.mrb[0].mxu0
        %v558 = vadd.f32 0.0, %v557
        %v559 = vpop.f32.mrb[0].mxu0
        %560 = vmatprep.mubr.bf16.mxu0 0
        %561 = vmatmul.mubr.bf16.gmra.mrb[0].mxu0 %v436
        %v562 = vpop.f32.mrb[0].mxu0
        %v563 = vadd.f32 0.0, %v562
        %v564 = vpop.f32.mrb[0].mxu0
        %v565 = vpop.f32.mrb[0].mxu0
        %v566 = vadd.f32 0.0, %v565
        %v567 = vpop.f32.mrb[0].mxu0
        %568 = vmatprep.mubr.bf16.mxu0 0
        %569 = vmatmul.mubr.bf16.gmra.mrb[0].mxu0 %v439
        %v570 = vpop.f32.mrb[0].mxu0
        %v571 = vadd.f32 0.0, %v570
        %v572 = vpop.f32.mrb[0].mxu0
        %v573 = vpop.f32.mrb[0].mxu0
        %v574 = vadd.f32 0.0, %v573
        %v575 = vpop.f32.mrb[0].mxu0
        %576 = vmatprep.mubr.bf16.mxu0 0
        %577 = vmatmul.mubr.bf16.gmra.mrb[0].mxu0 %v442
        %v578 = vpop.f32.mrb[0].mxu0
        %v579 = vadd.f32 0.0, %v578
        %v580 = vpop.f32.mrb[0].mxu0
        %v581 = vpop.f32.mrb[0].mxu0
        %v582 = vadd.f32 0.0, %v581
        %v583 = vpop.f32.mrb[0].mxu0
        %584 = vmatprep.mubr.bf16.mxu0 0
        %585 = vmatmul.mubr.bf16.gmra.mrb[0].mxu0 %v445
        %v586 = vpop.f32.mrb[0].mxu0
        %v587 = vadd.f32 0.0, %v586
        %v588 = vpop.f32.mrb[0].mxu0
        %v589 = vpop.f32.mrb[0].mxu0
        %v590 = vadd.f32 0.0, %v589
        %v591 = vpop.f32.mrb[0].mxu0
        %592 = vmatprep.mubr.bf16.mxu0 0
        %593 = vmatmul.mubr.bf16.gmra.mrb[0].mxu0 %v448
        %v594 = vpop.f32.mrb[0].mxu0
        %v595 = vadd.f32 0.0, %v594
        %v596 = vpop.f32.mrb[0].mxu0
        %v597 = vpop.f32.mrb[0].mxu0
        %v598 = vadd.f32 0.0, %v597
        %v599 = vpop.f32.mrb[0].mxu0
        %600 = vmatprep.mubr.bf16.mxu0 0
        %601 = vmatmul.mubr.bf16.gmra.mrb[0].mxu0 %v451
        %v602 = vpop.f32.mrb[0].mxu0
        %v603 = vadd.f32 0.0, %v602
        %v604 = vpop.f32.mrb[0].mxu0
        %v605 = vpop.f32.mrb[0].mxu0
        %v606 = vadd.f32 0.0, %v605
        %v607 = vpop.f32.mrb[0].mxu0
        %608 = vmatprep.mubr.bf16.mxu0 0
        %609 = vmatmul.mubr.bf16.gmra.mrb[0].mxu0 %v454
        %v610 = vpop.f32.mrb[0].mxu0
        %v611 = vadd.f32 0.0, %v610
        %v612 = vpop.f32.mrb[0].mxu0
        %v613 = vpop.f32.mrb[0].mxu0
        %v614 = vadd.f32 0.0, %v613
        %v615 = vpop.f32.mrb[0].mxu0
        %616 = vdwg.mxu0
        %v617 = vpack.c.bf16 %v494, %v491
        %v618 = vpack.c.bf16 %v502, %v499
        %v619 = vpack.c.bf16 %v510, %v507
        %v620 = vpack.c.bf16 %v518, %v515
        %v621 = vpack.c.bf16 %v526, %v523
        %v622 = vpack.c.bf16 %v534, %v531
        %v623 = vpack.c.bf16 %v542, %v539
        %v624 = vpack.c.bf16 %v550, %v547
        %v625 = vpack.c.bf16 %v558, %v555
        %v626 = vpack.c.bf16 %v566, %v563
        %v627 = vpack.c.bf16 %v574, %v571
        %v628 = vpack.c.bf16 %v582, %v579
        %v629 = vpack.c.bf16 %v590, %v587
        %v630 = vpack.c.bf16 %v598, %v595
        %v631 = vpack.c.bf16 %v606, %v603
        %v632 = vpack.c.bf16 %v614, %v611
        %v633 = vld [vmem:[%s248] sm:$0xff]
        %v634 = vld [vmem:[%s248 + $0x8] sm:$0xff]
        %v635 = vld [vmem:[%s248 + $0x10] sm:$0xff]
        %v636 = vld [vmem:[%s248 + $0x18] sm:$0xff]
        %v637 = vld [vmem:[%s248 + $0x20] sm:$0xff]
        %v638 = vld [vmem:[%s248 + $0x28] sm:$0xff]
        %v639 = vld [vmem:[%s248 + $0x30] sm:$0xff]
        %v640 = vld [vmem:[%s248 + $0x38] sm:$0xff]
        %v641 = vld [vmem:[%s248 + $0x40] sm:$0xff]
        %v642 = vld [vmem:[%s248 + $0x48] sm:$0xff]
        %v643 = vld [vmem:[%s248 + $0x50] sm:$0xff]
        %v644 = vld [vmem:[%s248 + $0x58] sm:$0xff]
        %v645 = vld [vmem:[%s248 + $0x60] sm:$0xff]
        %v646 = vld [vmem:[%s248 + $0x68] sm:$0xff]
        %v647 = vld [vmem:[%s248 + $0x70] sm:$0xff]
        %v648 = vld [vmem:[%s248 + $0x78] sm:$0xff]
        %v649 = vld [vmem:[%s219] sm:$0xff]
        %v650 = vld [vmem:[%s219 + $0x8] sm:$0xff]
        %v651 = vld [vmem:[%s219 + $0x10] sm:$0xff]
        %v652 = vld [vmem:[%s219 + $0x18] sm:$0xff]
        %v653 = vld [vmem:[%s219 + $0x20] sm:$0xff]
        %v654 = vld [vmem:[%s219 + $0x28] sm:$0xff]
        %v655 = vld [vmem:[%s219 + $0x30] sm:$0xff]
        %v656 = vld [vmem:[%s219 + $0x38] sm:$0xff]
        %v657 = vld [vmem:[%s219 + $0x40] sm:$0xff]
        %v658 = vld [vmem:[%s219 + $0x48] sm:$0xff]
        %v659 = vld [vmem:[%s219 + $0x50] sm:$0xff]
        %v660 = vld [vmem:[%s219 + $0x58] sm:$0xff]
        %v661 = vld [vmem:[%s219 + $0x60] sm:$0xff]
        %v662 = vld [vmem:[%s219 + $0x68] sm:$0xff]
        %v663 = vld [vmem:[%s219 + $0x70] sm:$0xff]
        %v664 = vld [vmem:[%s219 + $0x78] sm:$0xff]
        %v681 = vunpack.c.l.b16 %v649
        %v682 = vunpack.c.h.b16 %v649
        %v683 = vunpack.c.l.b16 %v650
        %v684 = vunpack.c.h.b16 %v650
        %v685 = vunpack.c.l.b16 %v651
        %v686 = vunpack.c.h.b16 %v651
        %v687 = vunpack.c.l.b16 %v652
        %v688 = vunpack.c.h.b16 %v652
        %v689 = vunpack.c.l.b16 %v653
        %v690 = vunpack.c.h.b16 %v653
        %v691 = vunpack.c.l.b16 %v654
        %v692 = vunpack.c.h.b16 %v654
        %v693 = vunpack.c.l.b16 %v655
        %v694 = vunpack.c.h.b16 %v655
        %v695 = vunpack.c.l.b16 %v656
        %v696 = vunpack.c.h.b16 %v656
        %v697 = vunpack.c.l.b16 %v657
        %v698 = vunpack.c.h.b16 %v657
        %v699 = vunpack.c.l.b16 %v658
        %v700 = vunpack.c.h.b16 %v658
        %v701 = vunpack.c.l.b16 %v659
        %v702 = vunpack.c.h.b16 %v659
        %v703 = vunpack.c.l.b16 %v660
        %v704 = vunpack.c.h.b16 %v660
        %v705 = vunpack.c.l.b16 %v661
        %v706 = vunpack.c.h.b16 %v661
        %v707 = vunpack.c.l.b16 %v662
        %v708 = vunpack.c.h.b16 %v662
        %v709 = vunpack.c.l.b16 %v663
        %v710 = vunpack.c.h.b16 %v663
        %v711 = vunpack.c.l.b16 %v664
        %v712 = vunpack.c.h.b16 %v664
        %v713 = vpack.c.b16 %v683, %v681
        %v714 = vpack.c.b16 %v684, %v682
        %v715 = vpack.c.b16 %v687, %v685
        %v716 = vpack.c.b16 %v688, %v686
        %v717 = vpack.c.b16 %v691, %v689
        %v718 = vpack.c.b16 %v692, %v690
        %v719 = vpack.c.b16 %v695, %v693
        %v720 = vpack.c.b16 %v696, %v694
        %v721 = vpack.c.b16 %v699, %v697
        %v722 = vpack.c.b16 %v700, %v698
        %v723 = vpack.c.b16 %v703, %v701
        %v724 = vpack.c.b16 %v704, %v702
        %v725 = vpack.c.b16 %v707, %v705
        %v726 = vpack.c.b16 %v708, %v706
        %v727 = vpack.c.b16 %v711, %v709
        %v728 = vpack.c.b16 %v712, %v710
        %745 = vmatprep.subr.bf16.mxu0 0
        %746 = vmatpush1.bf16.msra.mxu0 %v617
        %747 = vmatprep.subr.bf16.mxu0 0
        %748 = vmatpush1.bf16.msra.mxu0 %v618
        %749 = vmatprep.subr.bf16.mxu0 0
        %750 = vmatpush1.bf16.msra.mxu0 %v619
        %751 = vmatprep.subr.bf16.mxu0 0
        %752 = vmatpush1.bf16.msra.mxu0 %v620
        %753 = vmatprep.subr.bf16.mxu0 0
        %754 = vmatpush1.bf16.msra.mxu0 %v621
        %755 = vmatprep.subr.bf16.mxu0 0
        %756 = vmatpush1.bf16.msra.mxu0 %v622
        %757 = vmatprep.subr.bf16.mxu0 0
        %758 = vmatpush1.bf16.msra.mxu0 %v623
        %759 = vmatprep.subr.bf16.mxu0 0
        %760 = vmatpush1.bf16.msra.mxu0 %v624
        %761 = vmatprep.subr.bf16.mxu0 0
        %762 = vmatpush1.bf16.msra.mxu0 %v625
        %763 = vmatprep.subr.bf16.mxu0 0
        %764 = vmatpush1.bf16.msra.mxu0 %v626
        %765 = vmatprep.subr.bf16.mxu0 0
        %766 = vmatpush1.bf16.msra.mxu0 %v627
        %767 = vmatprep.subr.bf16.mxu0 0
        %768 = vmatpush1.bf16.msra.mxu0 %v628
        %769 = vmatprep.subr.bf16.mxu0 0
        %770 = vmatpush1.bf16.msra.mxu0 %v629
        %771 = vmatprep.subr.bf16.mxu0 0
        %772 = vmatpush1.bf16.msra.mxu0 %v630
        %773 = vmatprep.subr.bf16.mxu0 0
        %774 = vmatpush1.bf16.msra.mxu0 %v631
        %775 = vmatprep.subr.bf16.mxu0 0
        %776 = vmatpush1.bf16.msra.mxu0 %v632
        %777 = vmatprep.mubr.bf16.mxu0 %v714
        %778 = vmatmul.mubr.bf16.gmra.mrb[0].mxu0 %v713
        %v779 = vpop.f32.mrb[0].mxu0
        %v780 = vadd.f32 0.0, %v779
        %v781 = vpop.f32.mrb[0].mxu0
        %v782 = vpop.f32.mrb[0].mxu0
        %v783 = vadd.f32 0.0, %v782
        %v784 = vpop.f32.mrb[0].mxu0
        %785 = vmatprep.mubr.bf16.mxu0 %v716
        %786 = vmatmul.mubr.bf16.gmra.mrb[0].mxu0 %v715
        %v787 = vpop.f32.mrb[0].mxu0
        %v788 = vadd.f32 0.0, %v787
        %v789 = vpop.f32.mrb[0].mxu0
        %v790 = vpop.f32.mrb[0].mxu0
        %v791 = vadd.f32 0.0, %v790
        %v792 = vpop.f32.mrb[0].mxu0
        %793 = vmatprep.mubr.bf16.mxu0 %v718
        %794 = vmatmul.mubr.bf16.gmra.mrb[0].mxu0 %v717
        %v795 = vpop.f32.mrb[0].mxu0
        %v796 = vadd.f32 0.0, %v795
        %v797 = vpop.f32.mrb[0].mxu0
        %v798 = vpop.f32.mrb[0].mxu0
        %v799 = vadd.f32 0.0, %v798
        %v800 = vpop.f32.mrb[0].mxu0
        %801 = vmatprep.mubr.bf16.mxu0 %v720
        %802 = vmatmul.mubr.bf16.gmra.mrb[0].mxu0 %v719
        %v803 = vpop.f32.mrb[0].mxu0
        %v804 = vadd.f32 0.0, %v803
        %v805 = vpop.f32.mrb[0].mxu0
        %v806 = vpop.f32.mrb[0].mxu0
        %v807 = vadd.f32 0.0, %v806
        %v808 = vpop.f32.mrb[0].mxu0
        %809 = vmatprep.mubr.bf16.mxu0 %v722
        %810 = vmatmul.mubr.bf16.gmra.mrb[0].mxu0 %v721
        %v811 = vpop.f32.mrb[0].mxu0
        %v812 = vadd.f32 0.0, %v811
        %v813 = vpop.f32.mrb[0].mxu0
        %v814 = vpop.f32.mrb[0].mxu0
        %v815 = vadd.f32 0.0, %v814
        %v816 = vpop.f32.mrb[0].mxu0
        %817 = vmatprep.mubr.bf16.mxu0 %v724
        %818 = vmatmul.mubr.bf16.gmra.mrb[0].mxu0 %v723
        %v819 = vpop.f32.mrb[0].mxu0
        %v820 = vadd.f32 0.0, %v819
        %v821 = vpop.f32.mrb[0].mxu0
        %v822 = vpop.f32.mrb[0].mxu0
        %v823 = vadd.f32 0.0, %v822
        %v824 = vpop.f32.mrb[0].mxu0
        %825 = vmatprep.mubr.bf16.mxu0 %v726
        %826 = vmatmul.mubr.bf16.gmra.mrb[0].mxu0 %v725
        %v827 = vpop.f32.mrb[0].mxu0
        %v828 = vadd.f32 0.0, %v827
        %v829 = vpop.f32.mrb[0].mxu0
        %v830 = vpop.f32.mrb[0].mxu0
        %v831 = vadd.f32 0.0, %v830
        %v832 = vpop.f32.mrb[0].mxu0
        %833 = vmatprep.mubr.bf16.mxu0 %v728
        %834 = vmatmul.mubr.bf16.gmra.mrb[0].mxu0 %v727
        %v835 = vpop.f32.mrb[0].mxu0
        %v836 = vadd.f32 0.0, %v835
        %v837 = vpop.f32.mrb[0].mxu0
        %v838 = vpop.f32.mrb[0].mxu0
        %v839 = vadd.f32 0.0, %v838
        %v840 = vpop.f32.mrb[0].mxu0
        %841 = vdwg.mxu0
        %v842 = vadd.f32 %v633, %v780
        %v843 = vadd.f32 %v634, %v783
        %v844 = vadd.f32 %v635, %v788
        %v845 = vadd.f32 %v636, %v791
        %v846 = vadd.f32 %v637, %v796
        %v847 = vadd.f32 %v638, %v799
        %v848 = vadd.f32 %v639, %v804
        %v849 = vadd.f32 %v640, %v807
        %v850 = vadd.f32 %v641, %v812
        %v851 = vadd.f32 %v642, %v815
        %v852 = vadd.f32 %v643, %v820
        %v853 = vadd.f32 %v644, %v823
        %v854 = vadd.f32 %v645, %v828
        %v855 = vadd.f32 %v646, %v831
        %v856 = vadd.f32 %v647, %v836
        %v857 = vadd.f32 %v648, %v839
        %858 = vst [vmem:[%s248] sm:$0xff] %v842
        %859 = vst [vmem:[%s248 + $0x8] sm:$0xff] %v843
        %860 = vst [vmem:[%s248 + $0x10] sm:$0xff] %v844
        %861 = vst [vmem:[%s248 + $0x18] sm:$0xff] %v845
        %862 = vst [vmem:[%s248 + $0x20] sm:$0xff] %v846
        %863 = vst [vmem:[%s248 + $0x28] sm:$0xff] %v847
        %864 = vst [vmem:[%s248 + $0x30] sm:$0xff] %v848
        %865 = vst [vmem:[%s248 + $0x38] sm:$0xff] %v849
        %866 = vst [vmem:[%s248 + $0x40] sm:$0xff] %v850
        %867 = vst [vmem:[%s248 + $0x48] sm:$0xff] %v851
        %868 = vst [vmem:[%s248 + $0x50] sm:$0xff] %v852
        %869 = vst [vmem:[%s248 + $0x58] sm:$0xff] %v853
        %870 = vst [vmem:[%s248 + $0x60] sm:$0xff] %v854
        %871 = vst [vmem:[%s248 + $0x68] sm:$0xff] %v855
        %872 = vst [vmem:[%s248 + $0x70] sm:$0xff] %v856
        %873 = vst [vmem:[%s248 + $0x78] sm:$0xff] %v857
        // Predicated region
        $region45: #{tpu_custom_call.1} parent=35 // pred_check
          %p874 = pneg %p259
        $region46: #{tpu_custom_call.1} parent=35 // pred_check_branch
          %876 = sbr.rel (%p874) target = $region48
        $region47: #{tpu_custom_call.1} parent=35 // pred_region
          %v877 = vld [vmem:[%s248] sm:$0xff]
          %v878 = vld [vmem:[%s248 + $0x8] sm:$0xff]
          %v879 = vld [vmem:[%s248 + $0x10] sm:$0xff]
          %v880 = vld [vmem:[%s248 + $0x18] sm:$0xff]
          %v881 = vld [vmem:[%s248 + $0x20] sm:$0xff]
          %v882 = vld [vmem:[%s248 + $0x28] sm:$0xff]
          %v883 = vld [vmem:[%s248 + $0x30] sm:$0xff]
          %v884 = vld [vmem:[%s248 + $0x38] sm:$0xff]
          %v885 = vld [vmem:[%s248 + $0x40] sm:$0xff]
          %v886 = vld [vmem:[%s248 + $0x48] sm:$0xff]
          %v887 = vld [vmem:[%s248 + $0x50] sm:$0xff]
          %v888 = vld [vmem:[%s248 + $0x58] sm:$0xff]
          %v889 = vld [vmem:[%s248 + $0x60] sm:$0xff]
          %v890 = vld [vmem:[%s248 + $0x68] sm:$0xff]
          %v891 = vld [vmem:[%s248 + $0x70] sm:$0xff]
          %v892 = vld [vmem:[%s248 + $0x78] sm:$0xff]
          %v893 = vld [vmem:[%s3] sm:$0x1]
          %v895 = vlaneseq
          %v896 = vshrl.u32 %v895, 7
          %v897 = vsub.s32 0, %v896
          %v898 = vrot.slane %v893, %v897
          %v900 = vadd.f32 %v877, %v898
          %v901 = vadd.f32 %v878, %v898
          %v902 = vadd.f32 %v879, %v898
          %v903 = vadd.f32 %v880, %v898
          %v904 = vadd.f32 %v881, %v898
          %v905 = vadd.f32 %v882, %v898
          %v906 = vadd.f32 %v883, %v898
          %v907 = vadd.f32 %v884, %v898
          %v908 = vadd.f32 %v885, %v898
          %v909 = vadd.f32 %v886, %v898
          %v910 = vadd.f32 %v887, %v898
          %v911 = vadd.f32 %v888, %v898
          %v912 = vadd.f32 %v889, %v898
          %v913 = vadd.f32 %v890, %v898
          %v914 = vadd.f32 %v891, %v898
          %v915 = vadd.f32 %v892, %v898
          %916 = vst [vmem:[%s248] sm:$0xff] %v900
          %917 = vst [vmem:[%s248 + $0x8] sm:$0xff] %v901
          %918 = vst [vmem:[%s248 + $0x10] sm:$0xff] %v902
          %919 = vst [vmem:[%s248 + $0x18] sm:$0xff] %v903
          %920 = vst [vmem:[%s248 + $0x20] sm:$0xff] %v904
          %921 = vst [vmem:[%s248 + $0x28] sm:$0xff] %v905
          %922 = vst [vmem:[%s248 + $0x30] sm:$0xff] %v906
          %923 = vst [vmem:[%s248 + $0x38] sm:$0xff] %v907
          %924 = vst [vmem:[%s248 + $0x40] sm:$0xff] %v908
          %925 = vst [vmem:[%s248 + $0x48] sm:$0xff] %v909
          %926 = vst [vmem:[%s248 + $0x50] sm:$0xff] %v910
          %927 = vst [vmem:[%s248 + $0x58] sm:$0xff] %v911
          %928 = vst [vmem:[%s248 + $0x60] sm:$0xff] %v912
          %929 = vst [vmem:[%s248 + $0x68] sm:$0xff] %v913
          %930 = vst [vmem:[%s248 + $0x70] sm:$0xff] %v914
          %931 = vst [vmem:[%s248 + $0x78] sm:$0xff] %v915
        $region48: #{tpu_custom_call.1} parent=35 // pred_fallthru
          _
        %s932 = sand.u32 %s137, 1
        %s933 = scalar_lea.sflag [#allocation4], %s932
        %s934 = sand.u32 %s137, 1
        %s935 = smul.addr %s934, 128
        %s936 = scalar_lea.vmem [#allocation5], %s935
        // Predicated region
        $region49: #{tpu_custom_call.1} parent=35 // pred_check
          %p937 = pneg %p147
        $region50: #{tpu_custom_call.1} parent=35 // pred_check_branch
          %939 = sbr.rel (%p937) target = $region52
        $region51: #{tpu_custom_call.1} parent=35 // pred_region
          %s940 = smul.u32 16, %s25
          %s942 = ssub.s32 2048, 2048
          %943 = vsyncadd %s933, %s942
          %s944 = smul.addr %s940, 128
          %s945 = scalar_lea.hbm %s4, %s944
          %s946 = sshll.u32 %s936, 4
          %s947 = int_to_ptr.vmem [resolvable:$true] %s946
          %952 = dma.vmem_to_hbm [thread:$0]  %s947, 2048, %s945, %s933, 128, 128, 8
        $region52: #{tpu_custom_call.1} parent=35 // pred_fallthru
          _
      $region36: #{tpu_custom_call.1} parent=5 // pred_fallthru
        _
      %p953 = scmp.le.s32.totalorder 2, %s16
      // Predicated region
      $region53: #{tpu_custom_call.1} parent=5 // pred_check
        %p954 = pneg %p953
      $region54: #{tpu_custom_call.1} parent=5 // pred_check_branch
        %956 = sbr.rel (%p954) target = $region56
      $region55: #{tpu_custom_call.1} parent=5 // pred_region
        %s957 = ssub.s32 %s16, 2
        // Predicated region
        $region57: #{tpu_custom_call.1} parent=55 // pred_check
          %p958 = pneg %p153
        $region58: #{tpu_custom_call.1} parent=55 // pred_check_branch
          %960 = sbr.rel (%p958) target = $region60
        $region59: #{tpu_custom_call.1} parent=55 // pred_region
          %s961 = sand.u32 %s138, 1
          %s962 = scalar_lea.sflag [#allocation4], %s961
          %s963 = sand.u32 %s138, 1
          %s964 = smul.addr %s963, 128
          %s965 = scalar_lea.vmem [#allocation5], %s964
          %966 = dma.done %s962, 2048
        $region60: #{tpu_custom_call.1} parent=55 // pred_fallthru
          _
      $region56: #{tpu_custom_call.1} parent=5 // pred_fallthru
        _
    $region6: #{tpu_custom_call.1} parent=1 // loop_footer
      %s20 = sadd.s32 1, %s16
    $region7: #{tpu_custom_call.1} parent=1 // loop_footer_branch
      %15 = sbr.rel target = $region3
    $region8: #{tpu_custom_call.1} parent=1 // loop_exit
      _
    %967 = vsyncpa [#allocation3], 1
    %s968 = scalar_lea.sflag [#allocation3], 1
    %969 = vsyncpa %s968, 1
    %970 = vsyncpa [#allocation4], 1
    %s971 = scalar_lea.sflag [#allocation4], 1
    %972 = vsyncpa %s971, 1

</llo_original>
